<compile_context>
chip_gen: v7x
topology: tpu7x:2x2x1
jax: 0.10.0
libtpu: 0.0.40
codegen_flags: <defaults>
</compile_context>

<pallas_src>
import jax
import jax.numpy as jnp
from jax.experimental import pallas as pl
from jax.experimental.pallas import tpu as pltpu

IN_FEATURES = 256
OUT_FEATURES = 1
HALF = IN_FEATURES // 2  # 128 == one vreg lane width

# 2048 rows: 2 MiB f32 (1 MiB bf16) per h tile.  Double-buffered h + the
# 128-lane-padded output buffers stay under every generation's scoped-VMEM
# default (v5e 16 MiB, v6e/v7x 32 MiB), while amortizing the ~0.35 us
# per-grid-step pipeline overhead to a few percent of the tile's DMA time.
_DEFAULT_BLOCK_ROWS = 2048


def _action_kernel(h_ref, w_ref, b_ref, o_ref):
    # h_ref: [TB, 256] VMEM (producer dtype), w_ref: [1, 256] f32 VMEM,
    # b_ref: [1] f32 SMEM scalar, o_ref: [TB, 1] VMEM.
    h = h_ref[...].astype(jnp.float32)          # per-tile upcast (VPU, under DMA)
    prod = h * w_ref[...]                       # VPU, broadcast over rows
    # Fold 256 lanes -> 128 lanes on the VPU (128-lane-aligned static slices),
    # halving the XLU lane-reduce work.
    folded = prod[:, :HALF] + prod[:, HALF:]    # [TB, 128] VPU add
    acc = jnp.sum(folded, axis=-1, keepdims=True)  # XLU lane reduce -> [TB, 1]
    o_ref[...] = (acc + b_ref[0]).astype(o_ref.dtype)


def action_forward(h, weight, bias, *, block_rows=_DEFAULT_BLOCK_ROWS):
    """Pallas implementation of ACTION.forward (nn.Linear(256, 1)).

    Args:
      h:      [B, 256] (f32 or bf16; dtype is preserved end-to-end)
      weight: [1, 256] (PyTorch nn.Linear layout: [out, in])
      bias:   [1]
    Returns:
      [B, 1] with h.dtype
    """
    B = h.shape[0]
    out_dtype = h.dtype
    # Weight/bias are tiny; keep them lane-dense and in f32 for accumulation.
    w = weight.reshape(1, IN_FEATURES).astype(jnp.float32)
    b = bias.reshape(OUT_FEATURES).astype(jnp.float32)

    # Batch tile: full array for small B, otherwise a multiple-of-8 tile so the
    # (8, 128) block constraint holds on the partial last block.
    if B <= block_rows:
        tb = B
    else:
        tb = max(8, (block_rows // 8) * 8)
    grid = (pl.cdiv(B, tb),)

    h_bytes = B * IN_FEATURES * h.dtype.itemsize
    out_bytes = B * OUT_FEATURES * jnp.dtype(out_dtype).itemsize
    cost = pl.CostEstimate(
        flops=2 * B * IN_FEATURES,
        transcendentals=0,
        bytes_accessed=h_bytes + IN_FEATURES * 4 + 4 + out_bytes,
    )

    return pl.pallas_call(
        _action_kernel,
        out_shape=jax.ShapeDtypeStruct((B, OUT_FEATURES), out_dtype),
        grid=grid,
        in_specs=[
            pl.BlockSpec((tb, IN_FEATURES), lambda i: (i, 0)),   # h tile (streamed)
            pl.BlockSpec((1, IN_FEATURES), lambda i: (0, 0)),    # weight (resident)
            pl.BlockSpec(memory_space=pltpu.MemorySpace.SMEM),   # bias scalar
        ],
        out_specs=pl.BlockSpec((tb, OUT_FEATURES), lambda i: (i, 0)),
        compiler_params=pltpu.CompilerParams(
            dimension_semantics=("parallel",),   # v7x: shard batch over both TCs
        ),
        cost_estimate=cost,
    )(h, w, b)


def init_action_params(key):
    """Deterministic init matching nn.Linear(256, 1) parameter shapes."""
    k_w, k_b = jax.random.split(key)
    bound = 1.0 / jnp.sqrt(IN_FEATURES)  # PyTorch default U(-1/sqrt(in), 1/sqrt(in))
    weight = jax.random.uniform(
        k_w, (OUT_FEATURES, IN_FEATURES), jnp.float32, -bound, bound)
    bias = jax.random.uniform(
        k_b, (OUT_FEATURES,), jnp.float32, -bound, bound)
    return weight, bias


if __name__ == "__main__":
    key = jax.random.PRNGKey(0)
    k_h, k_params = jax.random.split(key)

    weight, bias = init_action_params(k_params)

    # Small primary test (single tile, full-array block).
    B = 8
    h = jax.random.normal(k_h, (B, IN_FEATURES), jnp.float32)
    out = jax.block_until_ready(action_forward(h, weight, bias))
    ref = h @ weight.T + bias
    assert out.shape == (B, OUT_FEATURES)
    assert jnp.allclose(out, ref, atol=1e-5, rtol=1e-5)

    # Multi-grid-step path with a partial last block (small shapes; force a
    # small tile to exercise the tiled path).
    B2 = 1025
    h2 = jax.random.normal(jax.random.PRNGKey(1), (B2, IN_FEATURES), jnp.float32)
    out2 = jax.block_until_ready(action_forward(h2, weight, bias, block_rows=256))
    ref2 = h2 @ weight.T + bias
    assert out2.shape == (B2, OUT_FEATURES)
    assert jnp.allclose(out2, ref2, atol=1e-5, rtol=1e-5)

    # bf16 producer path: no wrapper upcast, kernel upcasts per tile; output
    # keeps the producer dtype (matches a bf16 nn.Linear), accumulation in f32.
    h3 = h.astype(jnp.bfloat16)
    out3 = jax.block_until_ready(action_forward(h3, weight, bias))
    ref3 = h3.astype(jnp.float32) @ weight.T + bias
    assert out3.dtype == jnp.bfloat16
    assert jnp.allclose(out3.astype(jnp.float32), ref3, atol=2e-2, rtol=2e-2)

    print("KERNEL_OK")
</pallas_src>

<mosaic_0001>
module attributes {stable_mosaic.version = 11 : i64} {
  func.func @_action_kernel(%arg0: i32, %arg1: memref<8x256xf32, #tpu.memory_space<vmem>>, %arg2: memref<1x256xf32, #tpu.memory_space<vmem>>, %arg3: memref<1xf32, #tpu.memory_space<smem>>, %arg4: memref<8x1xf32, #tpu.memory_space<vmem>>) attributes {dimension_semantics = [#tpu.dimension_semantics<parallel>], iteration_bounds = array<i64: 1>, scalar_prefetch = 0 : i64, scratch_operands = 0 : i64, tpu.core_type = #tpu.core_type<tc>, window_params = [{transform_indices = @transform_0, window_bounds = array<i64: 8, 256>}, {pipeline_mode = #tpu.pipeline_mode<synchronous>, transform_indices = @transform_1, window_bounds = array<i64: 1, 256>}, {transform_indices = @transform_2, window_bounds = array<i64: 1>}, {transform_indices = @transform_3, window_bounds = array<i64: 8, 1>}]} {
    %c0 = arith.constant 0 : index
    %c0_0 = arith.constant 0 : index
    %0 = vector.load %arg1[%c0, %c0_0] : memref<8x256xf32, #tpu.memory_space<vmem>>, vector<8x256xf32>
    %c0_1 = arith.constant 0 : index
    %c0_2 = arith.constant 0 : index
    %1 = vector.load %arg2[%c0_1, %c0_2] : memref<1x256xf32, #tpu.memory_space<vmem>>, vector<1x256xf32>
    %2 = vector.broadcast %1 : vector<1x256xf32> to vector<8x256xf32>
    %3 = arith.mulf %0, %2 : vector<8x256xf32>
    %4 = vector.extract_strided_slice %3 {offsets = [0, 0], sizes = [8, 128], strides = [1, 1]} : vector<8x256xf32> to vector<8x128xf32>
    %5 = vector.extract_strided_slice %3 {offsets = [0, 128], sizes = [8, 128], strides = [1, 1]} : vector<8x256xf32> to vector<8x128xf32>
    %6 = arith.addf %4, %5 : vector<8x128xf32>
    %cst = arith.constant dense<0.000000e+00> : vector<8xf32>
    %7 = vector.multi_reduction <add>, %6, %cst [1] : vector<8x128xf32> to vector<8xf32>
    %8 = vector.shape_cast %7 : vector<8xf32> to vector<8x1xf32>
    %c0_3 = arith.constant 0 : index
    %9 = memref.load %arg3[%c0_3] : memref<1xf32, #tpu.memory_space<smem>>
    %10 = vector.broadcast %9 : f32 to vector<8x1xf32>
    %11 = arith.addf %8, %10 : vector<8x1xf32>
    %c0_4 = arith.constant 0 : index
    %c0_5 = arith.constant 0 : index
    %12 = vector.load %arg4[%c0_4, %c0_5] : memref<8x1xf32, #tpu.memory_space<vmem>>, vector<8x1xf32>
    tpu.vector_store %arg4[%c0_4, %c0_5], %11 {strides = array<i32>} : memref<8x1xf32, #tpu.memory_space<vmem>>, vector<8x1xf32>,
    return
  }
  func.func @transform_0(%arg0: i32) -> (i32, i32) {
    %c0_i32 = arith.constant 0 : i32
    %c0_i32_0 = arith.constant 0 : i32
    return %arg0, %c0_i32 : i32, i32
  }
  func.func @transform_1(%arg0: i32) -> (i32, i32) {
    %c0_i32 = arith.constant 0 : i32
    %c0_i32_0 = arith.constant 0 : i32
    %c0_i32_1 = arith.constant 0 : i32
    return %c0_i32, %c0_i32_0 : i32, i32
  }
  func.func @transform_2(%arg0: i32) -> i32 {
    %c0_i32 = arith.constant 0 : i32
    %c0_i32_0 = arith.constant 0 : i32
    return %c0_i32 : i32
  }
  func.func @transform_3(%arg0: i32) -> (i32, i32) {
    %c0_i32 = arith.constant 0 : i32
    %c0_i32_0 = arith.constant 0 : i32
    return %arg0, %c0_i32 : i32, i32
  }
}

</mosaic_0001>

<llo_original>
// kernel: tpu_custom_call.1
$region0: #{tpu_custom_call.1}
  #allocation0 [shape = 'u32[]', space=smem, size = 0x4, offset = 0x4, fixed_abs, tag = 'smem constant byte address 0x4 - core index']
  #allocation1 [shape = 'u32[144,128]{1,0:T(1,128)}', space=vmem, size = 0x12000, scoped, tag = 'internal scratch']
  #allocation2 [shape = 'f32[1]{0:T(128)S(6)}', space=smem, size = 0x200, scoped, tag = 'scoped memory for tpu_custom_call.1']
  %s0 = inlined_call_operand.hbm [shape: f32[8,256], index: 0, kind: input, shape index: {}]
  %s1 = inlined_call_operand.vmem [shape: f32[1,256], index: 1, kind: input, shape index: {}]
  %s2 = inlined_call_operand.<no memory space> [shape: f32[1], index: 2, kind: input, shape index: {}]
  %s3 = inlined_call_operand.vmem [shape: f32[8,1], index: 3, kind: output, shape index: {}]
  %s4 = sld [smem:[#allocation0]]
  $region26: #{tpu_custom_call.1} parent=0
    _
  %s6 = ssub.s32 1, %s4
  %s7 = scalar_select 0, %s6, %s4
  %8 = sst [smem:[#allocation2]] %s2
  $region1: #{tpu_custom_call.1} parent=0
    #allocation3 [shape = 'u8[8192]{0}', space=vmem, size = 0x2000, scoped, tag = 'input window, operand 0, single buffered']
    #allocation4 [shape = 's32[1]{0}', space=sflag, size = 0x4, scoped, tag = 'scoped memory for tpu_custom_call.1']
    %9 = vsyncpa [#allocation4], 0
    // Predicated region
    $region2: #{tpu_custom_call.1} parent=1 // pred_check
      _
    $region3: #{tpu_custom_call.1} parent=1 // pred_check_branch
      %11 = sbr.rel (0) target = $region5
    $region4: #{tpu_custom_call.1} parent=1 // pred_region
      %s13 = ssub.s32 256, 256
      %14 = vsyncadd [#allocation4], %s13
      %s16 = sshll.u32 [#allocation3], 4
      %s17 = int_to_ptr.vmem [resolvable:$true] %s16
      %19 = dma.hbm_to_vmem [thread:$0]  %s0, 256, %s17, [#allocation4]
    $region5: #{tpu_custom_call.1} parent=1 // pred_fallthru
      _
    // Predicated region
    $region6: #{tpu_custom_call.1} parent=1 // pred_check
      _
    $region7: #{tpu_custom_call.1} parent=1 // pred_check_branch
      %21 = sbr.rel (0) target = $region9
    $region8: #{tpu_custom_call.1} parent=1 // pred_region
      _
    $region9: #{tpu_custom_call.1} parent=1 // pred_fallthru
      _
    // Predicated region
    $region10: #{tpu_custom_call.1} parent=1 // pred_check
      _
    $region11: #{tpu_custom_call.1} parent=1 // pred_check_branch
      %23 = sbr.rel (0) target = $region13
    $region12: #{tpu_custom_call.1} parent=1 // pred_region
      _
    $region13: #{tpu_custom_call.1} parent=1 // pred_fallthru
      _
    // Predicated region
    $region14: #{tpu_custom_call.1} parent=1 // pred_check
      _
    $region15: #{tpu_custom_call.1} parent=1 // pred_check_branch
      %25 = sbr.rel (0) target = $region17
    $region16: #{tpu_custom_call.1} parent=1 // pred_region
      %26 = dma.done [#allocation4], 256
    $region17: #{tpu_custom_call.1} parent=1 // pred_fallthru
      _
    %v27 = vld [vmem:[#allocation3] sm:$0xff]
    %v28 = vld [vmem:[#allocation3 + $0x8] sm:$0xff]
    %v29 = vld [vmem:[%s1] sm:$0x3]
    %v31 = vlaneseq
    %v32 = vshrl.u32 %v31, 7
    %v33 = vsub.s32 0, %v32
    %v34 = vrot.slane %v29, %v33
    %v35 = vlaneseq
    %v36 = vshrl.u32 %v35, 7
    %v37 = vsub.s32 1, %v36
    %v38 = vrot.slane %v29, %v37
    %v41 = vmul.f32 %v27, %v34
    %v42 = vmul.f32 %v28, %v38
    %v43 = vadd.f32 %v41, %v42
    %44 = vadd.xlane.f32.xlu0 %v43
    %v45 = vpop.xlane.xlu0 %44
    %s46 = sld [smem:[#allocation2]]
    %v47 = vstv %s46
    %v48 = vadd.f32 %v45, %v47
    %vm49 = vcmask 7168
    %50 = vst.msk [vmem:[%s3] sm:$0xff] %vm49, %v48
    // Predicated region
    $region18: #{tpu_custom_call.1} parent=1 // pred_check
      _
    $region19: #{tpu_custom_call.1} parent=1 // pred_check_branch
      %52 = sbr.rel (0) target = $region21
    $region20: #{tpu_custom_call.1} parent=1 // pred_region
      _
    $region21: #{tpu_custom_call.1} parent=1 // pred_fallthru
      _
    // Predicated region
    $region22: #{tpu_custom_call.1} parent=1 // pred_check
      _
    $region23: #{tpu_custom_call.1} parent=1 // pred_check_branch
      %54 = sbr.rel (0) target = $region25
    $region24: #{tpu_custom_call.1} parent=1 // pred_region
      _
    $region25: #{tpu_custom_call.1} parent=1 // pred_fallthru
      _
    %55 = vsyncpa [#allocation4], 1

</llo_original>
